<compile_context>
chip_gen: v6e
topology: v6e:2x2x1
jax: 0.10.0
libtpu: 0.0.40
codegen_flags: <defaults>
</compile_context>

<pallas_src>
import functools

import jax
import jax.numpy as jnp
from jax.experimental import pallas as pl
from jax.experimental.pallas import tpu as pltpu


# ---------------------------------------------------------------------------
# Kernels
# ---------------------------------------------------------------------------


def _se_fused_kernel(x_ref, w1_ref, w2_ref, o_ref):
    """Single pass over a (block_b, C, L) window: pool -> excite -> scale."""
    # -- squeeze: mean over L, accumulated in f32.  Read the window for the
    #    reduction only; do not keep the full tile live across the MLP below.
    inv_l = jnp.float32(1.0 / x_ref.shape[-1])
    pooled = jnp.sum(x_ref[...], axis=-1, dtype=jnp.float32) * inv_l     # (bb, C)

    # -- excite: bottleneck MLP in the weights' native dtype / (out, in) layout.
    #    "A @ W^T" via dot_general on the channel axes (no transposes).
    w1 = w1_ref[...]                                                      # (Cr, C)
    w2 = w2_ref[...]                                                      # (C, Cr)
    h = jax.lax.dot_general(pooled.astype(w1.dtype), w1,
                            (((1,), (1,)), ((), ())),
                            preferred_element_type=jnp.float32)           # (bb, Cr)
    h = jnp.maximum(h, 0.0)
    s = jax.lax.dot_general(h.astype(w2.dtype), w2,
                            (((1,), (1,)), ((), ())),
                            preferred_element_type=jnp.float32)           # (bb, C)
    s = jax.nn.sigmoid(s)

    # -- scale: re-read the window; multiply & store in x.dtype (lane-dense
    #    when L % 128 == 0).
    o_ref[...] = x_ref[...] * s.astype(o_ref.dtype)[:, :, None]


def _se_pool_kernel(x_ref, sum_ref, *, length, block_l):
    """Two-pass path, pass A: accumulate sum over L.  Grid = (b blocks, l blocks)."""
    l = pl.program_id(1)

    @pl.when(l == 0)
    def _():
        sum_ref[...] = jnp.zeros_like(sum_ref)

    x = x_ref[...]
    if length % block_l != 0:
        # Mask the padded tail of a partial last L block (padding is garbage).
        pos = l * block_l + jax.lax.broadcasted_iota(jnp.int32, x.shape, 2)
        x = jnp.where(pos < length, x, 0)
    sum_ref[...] += jnp.sum(x, axis=-1, dtype=jnp.float32)


def _se_scale_kernel(pooled_ref, w1_ref, w2_ref, x_ref, o_ref, s_ref, *, inv_l):
    """Two-pass path, pass B: excite once per batch block (at l == 0) + scale."""
    l = pl.program_id(1)

    @pl.when(l == 0)
    def _():
        pooled = pooled_ref[...] * jnp.float32(inv_l)                     # (bb, C)
        w1 = w1_ref[...]
        w2 = w2_ref[...]
        h = jax.lax.dot_general(pooled.astype(w1.dtype), w1,
                                (((1,), (1,)), ((), ())),
                                preferred_element_type=jnp.float32)
        h = jnp.maximum(h, 0.0)
        s = jax.lax.dot_general(h.astype(w2.dtype), w2,
                                (((1,), (1,)), ((), ())),
                                preferred_element_type=jnp.float32)
        s_ref[...] = jax.nn.sigmoid(s)

    o_ref[...] = x_ref[...] * s_ref[...].astype(o_ref.dtype)[:, :, None]


# ---------------------------------------------------------------------------
# Tiling heuristics / wrapper
# ---------------------------------------------------------------------------

# Single-pass VMEM budget (conservative w.r.t. v7x: 64 MiB physical, 32 MiB
# default scoped).  Above this the wrapper switches to the two-pass form.
_FUSED_VMEM_CAP = 32 << 20


def _pick_block_b(batch, channels, length, itemsize, target_bytes=2 << 20):
    """Rows of x per fused grid step (no divisibility requirement on batch).

    Memory-bound kernel: ~1-2 MiB tiles already run near the HBM roofline, so
    once the VMEM budget is met any slack is spent on grid steps instead:
    prefer an even step count >= 4 (v7x: 2 TensorCores shard the 'parallel'
    axis and each wants >= 2 blocks to overlap DMA with compute), then 2
    steps, then simply the largest block that fits.  Tiles are never shrunk
    below ~0.5 MiB just to get more steps.
    """
    per_row = max(1, channels * length * itemsize)
    budget_rows = max(1, target_bytes // per_row)     # x tile ~<= target_bytes
    good_rows = (1 << 20) // per_row                  # ~1 MiB tile: near roofline
    full = min(batch, budget_rows)

    def cdiv(a, b):
        return -(-a // b)

    for steps in (4, 6, 8, 2):                        # preference order
        bb = cdiv(batch, steps)
        if bb > budget_rows or cdiv(batch, bb) != steps:
            continue
        if 2 * bb >= good_rows or bb == full:
            return bb
    return full


def _pick_two_pass_blocks(batch, channels, length, itemsize, target_bytes=2 << 20):
    """(block_b, block_l) for the two-pass path: lane-dense ~2 MiB L tiles."""
    bytes_per_l = max(1, channels * itemsize)
    block_l = (target_bytes // bytes_per_l) // 128 * 128
    block_l = min(length, max(128, block_l))          # multiple of 128, or == L
    block_b = min(batch, max(1, target_bytes // (bytes_per_l * block_l)))
    return block_b, block_l


def _compiler_params(block_bytes, weight_bytes, dimension_semantics):
    # in + out blocks double-buffered, weights double-buffered (revisited),
    # plus slack for small f32 temporaries and compiler-internal scratch.
    need = 4 * block_bytes + 4 * weight_bytes + (4 << 20)
    return pltpu.CompilerParams(
        dimension_semantics=dimension_semantics,
        vmem_limit_bytes=int(min(need, 64 << 20)),
    )


def se_block_1d(x, w1, w2, *, donate_x=False, two_pass=None,
                block_b=None, block_l=None):
    """SE block forward: out = x * sigmoid(relu(mean_L(x) @ W1^T) @ W2^T).

    x : (B, C, L)  activations (NCL, matching PyTorch).
    w1: (C//r, C)  first  nn.Linear weight (out, in), no bias.
    w2: (C, C//r)  second nn.Linear weight (out, in), no bias.
    donate_x : alias x's HBM buffer to the output (only effective when the
               caller actually donates x at the jit boundary).
    two_pass : force (True/False) the two-pass path; by default it is selected
               automatically when one (C, L) row is too large for the fused
               path's VMEM budget.
    block_b / block_l : optional overrides of the auto-picked tile sizes.
    """
    B, C, L = x.shape
    Cr, C_in = w1.shape
    assert C_in == C and w2.shape == (C, Cr), "weight shapes mismatch"

    itemsize = x.dtype.itemsize
    w_bytes = w1.size * w1.dtype.itemsize + w2.size * w2.dtype.itemsize
    out_shape = jax.ShapeDtypeStruct((B, C, L), x.dtype)

    if two_pass is None:
        # Can a (1, C, L) in/out block pair (double-buffered) live in VMEM?
        two_pass = 4 * C * L * itemsize + 4 * w_bytes + (4 << 20) > _FUSED_VMEM_CAP

    if not two_pass:
        bb = block_b if block_b is not None else _pick_block_b(B, C, L, itemsize)
        grid = (pl.cdiv(B, bb),)
        block_bytes = bb * C * L * itemsize
        cost = pl.CostEstimate(
            flops=3 * B * C * L + 4 * B * C * Cr,      # pool + scale + 2 matmuls
            transcendentals=B * C,                     # sigmoid
            bytes_accessed=2 * B * C * L * itemsize + w_bytes,
        )
        return pl.pallas_call(
            _se_fused_kernel,
            out_shape=out_shape,
            grid_spec=pltpu.PrefetchScalarGridSpec(
                num_scalar_prefetch=0,
                grid=grid,
                in_specs=[
                    pl.BlockSpec((bb, C, L), lambda b: (b, 0, 0)),
                    pl.BlockSpec((Cr, C), lambda b: (0, 0)),
                    pl.BlockSpec((C, Cr), lambda b: (0, 0)),
                ],
                out_specs=pl.BlockSpec((bb, C, L), lambda b: (b, 0, 0)),
            ),
            compiler_params=_compiler_params(block_bytes, w_bytes, ("parallel",)),
            cost_estimate=cost,
            input_output_aliases=({0: 0} if donate_x else {}),
        )(x, w1, w2)

    # ---- two-pass fallback: L-tiled pool pass + L-tiled excite/scale pass ----
    bb, bl = _pick_two_pass_blocks(B, C, L, itemsize)
    if block_b is not None:
        bb = block_b
    if block_l is not None:
        bl = block_l
    grid = (pl.cdiv(B, bb), pl.cdiv(L, bl))
    block_bytes = bb * C * bl * itemsize

    pooled_sum = pl.pallas_call(
        functools.partial(_se_pool_kernel, length=L, block_l=bl),
        out_shape=jax.ShapeDtypeStruct((B, C), jnp.float32),
        grid_spec=pltpu.PrefetchScalarGridSpec(
            num_scalar_prefetch=0,
            grid=grid,
            in_specs=[pl.BlockSpec((bb, C, bl), lambda b, l: (b, 0, l))],
            out_specs=pl.BlockSpec((bb, C), lambda b, l: (b, 0)),
        ),
        compiler_params=_compiler_params(block_bytes, 0, ("parallel", "arbitrary")),
        cost_estimate=pl.CostEstimate(
            flops=B * C * L, transcendentals=0,
            bytes_accessed=B * C * L * itemsize + B * C * 4),
    )(x)

    return pl.pallas_call(
        functools.partial(_se_scale_kernel, inv_l=1.0 / L),
        out_shape=out_shape,
        grid_spec=pltpu.PrefetchScalarGridSpec(
            num_scalar_prefetch=0,
            grid=grid,
            in_specs=[
                pl.BlockSpec((bb, C), lambda b, l: (b, 0)),
                pl.BlockSpec((Cr, C), lambda b, l: (0, 0)),
                pl.BlockSpec((C, Cr), lambda b, l: (0, 0)),
                pl.BlockSpec((bb, C, bl), lambda b, l: (b, 0, l)),
            ],
            out_specs=pl.BlockSpec((bb, C, bl), lambda b, l: (b, 0, l)),
            scratch_shapes=[pltpu.VMEM((bb, C), jnp.float32)],
        ),
        compiler_params=_compiler_params(block_bytes, w_bytes,
                                         ("parallel", "arbitrary")),
        cost_estimate=pl.CostEstimate(
            flops=2 * B * C * L + 4 * B * C * Cr,
            transcendentals=B * C,
            bytes_accessed=2 * B * C * L * itemsize + B * C * 4 + w_bytes),
        input_output_aliases=({3: 0} if donate_x else {}),
    )(pooled_sum, w1, w2, x)


def se_block_1d_ref(x, w1, w2):
    """Pure-JAX reference matching the PyTorch forward."""
    pooled = jnp.mean(x, axis=-1)                     # (B, C)
    h = jnp.maximum(pooled @ w1.T, 0.0)               # (B, Cr)
    s = jax.nn.sigmoid(h @ w2.T)                      # (B, C)
    return x * s[:, :, None]


if __name__ == "__main__":
    B, C, L = 2, 64, 128
    reduction = 16
    Cr = C // reduction

    key = jax.random.PRNGKey(0)
    kx, k1, k2, k3, k4 = jax.random.split(key, 5)
    x = jax.random.normal(kx, (B, C, L), dtype=jnp.float32)
    # Deterministic synthetic weights (PyTorch nn.Linear shape: (out, in)).
    w1 = 0.1 * jax.random.normal(k1, (Cr, C), dtype=jnp.float32)
    w2 = 0.1 * jax.random.normal(k2, (C, Cr), dtype=jnp.float32)

    ref = se_block_1d_ref(x, w1, w2)

    # 1) Fused single-pass path.
    out = jax.block_until_ready(se_block_1d(x, w1, w2))
    assert out.shape == (B, C, L)
    assert jnp.allclose(out, ref, atol=1e-5, rtol=1e-5), "fused path mismatch"

    # 2) Two-pass fallback path (forced), same shape.
    out2 = jax.block_until_ready(se_block_1d(x, w1, w2, two_pass=True))
    assert jnp.allclose(out2, ref, atol=1e-5, rtol=1e-5), "two-pass mismatch"

    # 3) Fused path with a partial last batch block (cdiv grid, B=3, block_b=2).
    x3 = jax.random.normal(k3, (3, C, L), dtype=jnp.float32)
    ref3 = se_block_1d_ref(x3, w1, w2)
    out3 = jax.block_until_ready(se_block_1d(x3, w1, w2, block_b=2))
    assert jnp.allclose(out3, ref3, atol=1e-5, rtol=1e-5), "partial-B mismatch"

    # 4) Two-pass path with L tiling and a partial (masked) last L block.
    x4 = jax.random.normal(k4, (3, C, 320), dtype=jnp.float32)
    ref4 = se_block_1d_ref(x4, w1, w2)
    out4 = jax.block_until_ready(
        se_block_1d(x4, w1, w2, two_pass=True, block_l=128))
    assert jnp.allclose(out4, ref4, atol=1e-5, rtol=1e-5), "L-tiled mismatch"

    print("KERNEL_OK")
</pallas_src>

<mosaic_0001>
module attributes {stable_mosaic.version = 11 : i64} {
  func.func @_se_fused_kernel(%arg0: i32, %arg1: memref<2x64x128xf32, #tpu.memory_space<vmem>>, %arg2: memref<4x64xf32, #tpu.memory_space<vmem>>, %arg3: memref<64x4xf32, #tpu.memory_space<vmem>>, %arg4: memref<2x64x128xf32, #tpu.memory_space<vmem>>) attributes {dimension_semantics = [#tpu.dimension_semantics<parallel>], iteration_bounds = array<i64: 1>, scalar_prefetch = 0 : i64, scratch_operands = 0 : i64, tpu.core_type = #tpu.core_type<tc>, window_params = [{transform_indices = @transform_0, window_bounds = array<i64: 2, 64, 128>}, {pipeline_mode = #tpu.pipeline_mode<synchronous>, transform_indices = @transform_1, window_bounds = array<i64: 4, 64>}, {pipeline_mode = #tpu.pipeline_mode<synchronous>, transform_indices = @transform_2, window_bounds = array<i64: 64, 4>}, {transform_indices = @transform_3, window_bounds = array<i64: 2, 64, 128>}]} {
    %c0 = arith.constant 0 : index
    %c0_0 = arith.constant 0 : index
    %c0_1 = arith.constant 0 : index
    %0 = vector.load %arg1[%c0, %c0_0, %c0_1] : memref<2x64x128xf32, #tpu.memory_space<vmem>>, vector<2x64x128xf32>
    %cst = arith.constant dense<0.000000e+00> : vector<2x64xf32>
    %1 = vector.multi_reduction <add>, %0, %cst [2] : vector<2x64x128xf32> to vector<2x64xf32>
    %cst_2 = arith.constant 7.812500e-03 : f32
    %2 = vector.broadcast %cst_2 : f32 to vector<2x64xf32>
    %3 = arith.mulf %1, %2 : vector<2x64xf32>
    %c0_3 = arith.constant 0 : index
    %c0_4 = arith.constant 0 : index
    %4 = vector.load %arg2[%c0_3, %c0_4] : memref<4x64xf32, #tpu.memory_space<vmem>>, vector<4x64xf32>
    %c0_5 = arith.constant 0 : index
    %c0_6 = arith.constant 0 : index
    %5 = vector.load %arg3[%c0_5, %c0_6] : memref<64x4xf32, #tpu.memory_space<vmem>>, vector<64x4xf32>
    %cst_7 = arith.constant dense<0.000000e+00> : vector<2x4xf32>
    %6 = tpu.matmul %3, %4, %cst_7 {dimension_numbers = #tpu.dot_dimension_numbers<[1], [1], [0], [0], [0, 0, 1, 0], [], []>} : vector<2x64xf32>, vector<4x64xf32>, vector<2x4xf32> -> vector<2x4xf32>
    %cst_8 = arith.constant 0.000000e+00 : f32
    %7 = vector.broadcast %cst_8 : f32 to vector<2x4xf32>
    %8 = arith.maximumf %6, %7 : vector<2x4xf32>
    %cst_9 = arith.constant dense<0.000000e+00> : vector<2x64xf32>
    %9 = tpu.matmul %8, %5, %cst_9 {dimension_numbers = #tpu.dot_dimension_numbers<[1], [1], [0], [0], [0, 0, 1, 0], [], []>} : vector<2x4xf32>, vector<64x4xf32>, vector<2x64xf32> -> vector<2x64xf32>
    %10 = arith.negf %9 : vector<2x64xf32>
    %11 = math.exp %10 : vector<2x64xf32>
    %cst_10 = arith.constant 1.000000e+00 : f32
    %12 = vector.broadcast %cst_10 : f32 to vector<2x64xf32>
    %13 = arith.addf %12, %11 : vector<2x64xf32>
    %14 = arith.divf %12, %13 : vector<2x64xf32>
    %c0_11 = arith.constant 0 : index
    %c0_12 = arith.constant 0 : index
    %c0_13 = arith.constant 0 : index
    %15 = vector.load %arg1[%c0_11, %c0_12, %c0_13] : memref<2x64x128xf32, #tpu.memory_space<vmem>>, vector<2x64x128xf32>
    %16 = vector.shape_cast %14 : vector<2x64xf32> to vector<2x64x1xf32>
    %17 = vector.broadcast %16 : vector<2x64x1xf32> to vector<2x64x128xf32>
    %18 = arith.mulf %15, %17 : vector<2x64x128xf32>
    %c0_14 = arith.constant 0 : index
    %c0_15 = arith.constant 0 : index
    %c0_16 = arith.constant 0 : index
    %19 = vector.load %arg4[%c0_14, %c0_15, %c0_16] : memref<2x64x128xf32, #tpu.memory_space<vmem>>, vector<2x64x128xf32>
    tpu.vector_store %arg4[%c0_14, %c0_15, %c0_16], %18 {strides = array<i32>} : memref<2x64x128xf32, #tpu.memory_space<vmem>>, vector<2x64x128xf32>,
    return
  }
  func.func @transform_0(%arg0: i32) -> (i32, i32, i32) {
    %c0_i32 = arith.constant 0 : i32
    %c0_i32_0 = arith.constant 0 : i32
    %c0_i32_1 = arith.constant 0 : i32
    return %arg0, %c0_i32, %c0_i32_0 : i32, i32, i32
  }
  func.func @transform_1(%arg0: i32) -> (i32, i32) {
    %c0_i32 = arith.constant 0 : i32
    %c0_i32_0 = arith.constant 0 : i32
    %c0_i32_1 = arith.constant 0 : i32
    return %c0_i32, %c0_i32_0 : i32, i32
  }
  func.func @transform_2(%arg0: i32) -> (i32, i32) {
    %c0_i32 = arith.constant 0 : i32
    %c0_i32_0 = arith.constant 0 : i32
    %c0_i32_1 = arith.constant 0 : i32
    return %c0_i32, %c0_i32_0 : i32, i32
  }
  func.func @transform_3(%arg0: i32) -> (i32, i32, i32) {
    %c0_i32 = arith.constant 0 : i32
    %c0_i32_0 = arith.constant 0 : i32
    %c0_i32_1 = arith.constant 0 : i32
    return %arg0, %c0_i32, %c0_i32_0 : i32, i32, i32
  }
}

</mosaic_0001>

<llo_original>
// kernel: tpu_custom_call.1
$region0: #{tpu_custom_call.1}
  #allocation0 [shape = 'u32[]', space=smem, size = 0x4, offset = 0x4, fixed_abs, tag = 'smem constant byte address 0x4 - core index']
  #allocation1 [shape = 'u32[144,128]{1,0:T(1,128)}', space=vmem, size = 0x12000, scoped, tag = 'internal scratch']
  %s0 = inlined_call_operand.hbm [shape: f32[2,64,128], index: 0, kind: input, shape index: {}]
  %s1 = inlined_call_operand.vmem [shape: f32[4,64], index: 1, kind: input, shape index: {}]
  %s2 = inlined_call_operand.vmem [shape: f32[64,4], index: 2, kind: input, shape index: {}]
  %s3 = inlined_call_operand.hbm [shape: f32[2,64,128], index: 3, kind: output, shape index: {}]
  %s4 = sld [smem:[#allocation0]]
  $region26: #{tpu_custom_call.1} parent=0
    _
  %s6 = ssub.s32 1, %s4
  %s7 = scalar_select 0, %s6, %s4
  $region1: #{tpu_custom_call.1} parent=0
    #allocation2 [shape = 'u8[65536]{0}', space=vmem, size = 0x10000, scoped, tag = 'input window, operand 0, single buffered']
    #allocation3 [shape = 's32[1]{0}', space=sflag, size = 0x4, scoped, tag = 'scoped memory for tpu_custom_call.1']
    #allocation4 [shape = 's32[1]{0}', space=sflag, size = 0x4, scoped, tag = 'scoped memory for tpu_custom_call.1']
    #allocation5 [shape = 'u8[65536]{0}', space=vmem, size = 0x10000, scoped, tag = 'output window, operand 0, single buffered']
    %8 = vsyncpa [#allocation3], 0
    %9 = vsyncpa [#allocation4], 0
    // Predicated region
    $region2: #{tpu_custom_call.1} parent=1 // pred_check
      _
    $region3: #{tpu_custom_call.1} parent=1 // pred_check_branch
      %11 = sbr.rel (0) target = $region5
    $region4: #{tpu_custom_call.1} parent=1 // pred_region
      %s13 = ssub.s32 2048, 2048
      %14 = vsyncadd [#allocation3], %s13
      %s15 = sshll.u32 [#allocation2], 4
      %s16 = int_to_ptr.vmem [resolvable:$true] %s15
      %21 = dma.hbm_to_vmem [thread:$0]  %s0, 2048, %s16, [#allocation3], 128, 128, 8
    $region5: #{tpu_custom_call.1} parent=1 // pred_fallthru
      _
    // Predicated region
    $region6: #{tpu_custom_call.1} parent=1 // pred_check
      _
    $region7: #{tpu_custom_call.1} parent=1 // pred_check_branch
      %23 = sbr.rel (0) target = $region9
    $region8: #{tpu_custom_call.1} parent=1 // pred_region
      _
    $region9: #{tpu_custom_call.1} parent=1 // pred_fallthru
      _
    // Predicated region
    $region10: #{tpu_custom_call.1} parent=1 // pred_check
      _
    $region11: #{tpu_custom_call.1} parent=1 // pred_check_branch
      %25 = sbr.rel (0) target = $region13
    $region12: #{tpu_custom_call.1} parent=1 // pred_region
      _
    $region13: #{tpu_custom_call.1} parent=1 // pred_fallthru
      _
    // Predicated region
    $region14: #{tpu_custom_call.1} parent=1 // pred_check
      _
    $region15: #{tpu_custom_call.1} parent=1 // pred_check_branch
      %27 = sbr.rel (0) target = $region17
    $region16: #{tpu_custom_call.1} parent=1 // pred_region
      %28 = dma.done [#allocation3], 2048
    $region17: #{tpu_custom_call.1} parent=1 // pred_fallthru
      _
    %v29 = vld [vmem:[#allocation2] sm:$0xff]
    %v30 = vld [vmem:[#allocation2 + $0x8] sm:$0xff]
    %v31 = vld [vmem:[#allocation2 + $0x10] sm:$0xff]
    %v32 = vld [vmem:[#allocation2 + $0x18] sm:$0xff]
    %v33 = vld [vmem:[#allocation2 + $0x20] sm:$0xff]
    %v34 = vld [vmem:[#allocation2 + $0x28] sm:$0xff]
    %v35 = vld [vmem:[#allocation2 + $0x30] sm:$0xff]
    %v36 = vld [vmem:[#allocation2 + $0x38] sm:$0xff]
    %v37 = vld [vmem:[#allocation2 + $0x40] sm:$0xff]
    %v38 = vld [vmem:[#allocation2 + $0x48] sm:$0xff]
    %v39 = vld [vmem:[#allocation2 + $0x50] sm:$0xff]
    %v40 = vld [vmem:[#allocation2 + $0x58] sm:$0xff]
    %v41 = vld [vmem:[#allocation2 + $0x60] sm:$0xff]
    %v42 = vld [vmem:[#allocation2 + $0x68] sm:$0xff]
    %v43 = vld [vmem:[#allocation2 + $0x70] sm:$0xff]
    %v44 = vld [vmem:[#allocation2 + $0x78] sm:$0xff]
    %45 = vadd.xlane.f32.xlu0 %v29
    %v46 = vpop.xlane.xlu0 %45
    %47 = vadd.xlane.f32.xlu0 %v30
    %v48 = vpop.xlane.xlu0 %47
    %49 = vadd.xlane.f32.xlu0 %v31
    %v50 = vpop.xlane.xlu0 %49
    %51 = vadd.xlane.f32.xlu0 %v32
    %v52 = vpop.xlane.xlu0 %51
    %53 = vadd.xlane.f32.xlu0 %v33
    %v54 = vpop.xlane.xlu0 %53
    %55 = vadd.xlane.f32.xlu0 %v34
    %v56 = vpop.xlane.xlu0 %55
    %57 = vadd.xlane.f32.xlu0 %v35
    %v58 = vpop.xlane.xlu0 %57
    %59 = vadd.xlane.f32.xlu0 %v36
    %v60 = vpop.xlane.xlu0 %59
    %61 = vadd.xlane.f32.xlu0 %v37
    %v62 = vpop.xlane.xlu0 %61
    %63 = vadd.xlane.f32.xlu0 %v38
    %v64 = vpop.xlane.xlu0 %63
    %65 = vadd.xlane.f32.xlu0 %v39
    %v66 = vpop.xlane.xlu0 %65
    %67 = vadd.xlane.f32.xlu0 %v40
    %v68 = vpop.xlane.xlu0 %67
    %69 = vadd.xlane.f32.xlu0 %v41
    %v70 = vpop.xlane.xlu0 %69
    %71 = vadd.xlane.f32.xlu0 %v42
    %v72 = vpop.xlane.xlu0 %71
    %73 = vadd.xlane.f32.xlu0 %v43
    %v74 = vpop.xlane.xlu0 %73
    %75 = vadd.xlane.f32.xlu0 %v44
    %v76 = vpop.xlane.xlu0 %75
    %v77 = vmul.f32 %v46, 0.0078125
    %v78 = vmul.f32 %v48, 0.0078125
    %v79 = vmul.f32 %v50, 0.0078125
    %v80 = vmul.f32 %v52, 0.0078125
    %v81 = vmul.f32 %v54, 0.0078125
    %v82 = vmul.f32 %v56, 0.0078125
    %v83 = vmul.f32 %v58, 0.0078125
    %v84 = vmul.f32 %v60, 0.0078125
    %v85 = vmul.f32 %v62, 0.0078125
    %v86 = vmul.f32 %v64, 0.0078125
    %v87 = vmul.f32 %v66, 0.0078125
    %v88 = vmul.f32 %v68, 0.0078125
    %v89 = vmul.f32 %v70, 0.0078125
    %v90 = vmul.f32 %v72, 0.0078125
    %v91 = vmul.f32 %v74, 0.0078125
    %v92 = vmul.f32 %v76, 0.0078125
    %v93 = vld [vmem:[%s1] sm:$0xf]
    %v94 = vld [vmem:[%s2] sm:$0xff]
    %v95 = vld [vmem:[%s2 + $0x8] sm:$0xff]
    %v96 = vld [vmem:[%s2 + $0x10] sm:$0xff]
    %v97 = vld [vmem:[%s2 + $0x18] sm:$0xff]
    %v98 = vld [vmem:[%s2 + $0x20] sm:$0xff]
    %v99 = vld [vmem:[%s2 + $0x28] sm:$0xff]
    %v100 = vld [vmem:[%s2 + $0x30] sm:$0xff]
    %v101 = vld [vmem:[%s2 + $0x38] sm:$0xff]
    %v118 = vlaneseq
    %v119 = vand.u32 %v118, 127
    %v120 = vlaneseq
    %v121 = vshrl.u32 %v120, 7
    %v122 = vsub.s32 %v119, %v121
    %v123 = vrot.slane %v77, %v122
    %v124 = vadd.s32 %v119, 4294967288
    %v125 = vlaneseq
    %v126 = vshrl.u32 %v125, 7
    %v127 = vsub.s32 %v124, %v126
    %v128 = vrot.slane %v78, %v127
    %vm129 = vcmask 130112
    %v130 = vsel %vm129, %v128, %v123
    %v131 = vadd.s32 %v119, 4294967280
    %v132 = vlaneseq
    %v133 = vshrl.u32 %v132, 7
    %v134 = vsub.s32 %v131, %v133
    %v135 = vrot.slane %v79, %v134
    %vm136 = vcmask 195712
    %v137 = vsel %vm136, %v135, %v130
    %v138 = vadd.s32 %v119, 4294967272
    %v139 = vlaneseq
    %v140 = vshrl.u32 %v139, 7
    %v141 = vsub.s32 %v138, %v140
    %v142 = vrot.slane %v80, %v141
    %vm143 = vcmask 261312
    %v144 = vsel %vm143, %v142, %v137
    %v145 = vadd.s32 %v119, 4294967264
    %v146 = vlaneseq
    %v147 = vshrl.u32 %v146, 7
    %v148 = vsub.s32 %v145, %v147
    %v149 = vrot.slane %v81, %v148
    %vm150 = vcmask 326912
    %v151 = vsel %vm150, %v149, %v144
    %v152 = vadd.s32 %v119, 4294967256
    %v153 = vlaneseq
    %v154 = vshrl.u32 %v153, 7
    %v155 = vsub.s32 %v152, %v154
    %v156 = vrot.slane %v82, %v155
    %vm157 = vcmask 392512
    %v158 = vsel %vm157, %v156, %v151
    %v159 = vadd.s32 %v119, 4294967248
    %v160 = vlaneseq
    %v161 = vshrl.u32 %v160, 7
    %v162 = vsub.s32 %v159, %v161
    %v163 = vrot.slane %v83, %v162
    %vm164 = vcmask 458112
    %v165 = vsel %vm164, %v163, %v158
    %v166 = vadd.s32 %v119, 4294967240
    %v167 = vlaneseq
    %v168 = vshrl.u32 %v167, 7
    %v169 = vsub.s32 %v166, %v168
    %v170 = vrot.slane %v84, %v169
    %vm171 = vcmask 523712
    %v172 = vsel %vm171, %v170, %v165
    %v173 = vlaneseq
    %v174 = vshrl.u32 %v173, 7
    %v175 = vsub.s32 %v119, %v174
    %v176 = vrot.slane %v85, %v175
    %v177 = vlaneseq
    %v178 = vshrl.u32 %v177, 7
    %v179 = vsub.s32 %v124, %v178
    %v180 = vrot.slane %v86, %v179
    %v181 = vsel %vm129, %v180, %v176
    %v182 = vlaneseq
    %v183 = vshrl.u32 %v182, 7
    %v184 = vsub.s32 %v131, %v183
    %v185 = vrot.slane %v87, %v184
    %v186 = vsel %vm136, %v185, %v181
    %v187 = vlaneseq
    %v188 = vshrl.u32 %v187, 7
    %v189 = vsub.s32 %v138, %v188
    %v190 = vrot.slane %v88, %v189
    %v191 = vsel %vm143, %v190, %v186
    %v192 = vlaneseq
    %v193 = vshrl.u32 %v192, 7
    %v194 = vsub.s32 %v145, %v193
    %v195 = vrot.slane %v89, %v194
    %v196 = vsel %vm150, %v195, %v191
    %v197 = vlaneseq
    %v198 = vshrl.u32 %v197, 7
    %v199 = vsub.s32 %v152, %v198
    %v200 = vrot.slane %v90, %v199
    %v201 = vsel %vm157, %v200, %v196
    %v202 = vlaneseq
    %v203 = vshrl.u32 %v202, 7
    %v204 = vsub.s32 %v159, %v203
    %v205 = vrot.slane %v91, %v204
    %v206 = vsel %vm164, %v205, %v201
    %v207 = vlaneseq
    %v208 = vshrl.u32 %v207, 7
    %v209 = vsub.s32 %v166, %v208
    %v210 = vrot.slane %v92, %v209
    %v211 = vsel %vm171, %v210, %v206
    %vm212 = vcmask 1041409
    %v213 = vsel %vm212, %v211, %v172
    %vm214 = vcmask 523264
    %v215 = vsel %vm214, %v213, 0
    %v218 = vsel %vm214, %v93, 0
    %220 = vmatprep.subr.mxu0 0.0
    %221 = vmatpush1.xpose.msra.mxu0 0.0
    %222 = vmatprep.subr.mxu0 0.0
    %223 = vmatpush1.xpose.msra.mxu0 0.0
    %224 = vmatprep.subr.mxu0 0.0
    %225 = vmatpush1.xpose.msra.mxu0 0.0
    %226 = vmatprep.subr.mxu0 0.0
    %227 = vmatpush1.xpose.msra.mxu0 0.0
    %228 = vmatprep.subr.mxu0 0.0
    %229 = vmatpush1.xpose.msra.mxu0 0.0
    %230 = vmatprep.subr.mxu0 0.0
    %231 = vmatpush1.xpose.msra.mxu0 0.0
    %232 = vmatprep.subr.mxu0 0.0
    %233 = vmatpush1.xpose.msra.mxu0 0.0
    %234 = vmatprep.subr.mxu0 0.0
    %235 = vmatpush1.xpose.msra.mxu0 0.0
    %236 = vmatprep.subr.mxu0 0.0
    %237 = vmatpush1.xpose.msra.mxu0 0.0
    %238 = vmatprep.subr.mxu0 0.0
    %239 = vmatpush1.xpose.msra.mxu0 0.0
    %240 = vmatprep.subr.mxu0 0.0
    %241 = vmatpush1.xpose.msra.mxu0 0.0
    %242 = vmatprep.subr.mxu0 0.0
    %243 = vmatpush1.xpose.msra.mxu0 0.0
    %244 = vmatprep.subr.mxu0 0.0
    %245 = vmatpush1.xpose.msra.mxu0 0.0
    %246 = vmatprep.subr.mxu0 0.0
    %247 = vmatpush1.xpose.msra.mxu0 0.0
    %248 = vmatprep.subr.mxu0 0.0
    %249 = vmatpush1.xpose.msra.mxu0 0.0
    %250 = vmatprep.subr.mxu0 0.0
    %251 = vmatpush1.xpose.msra.mxu0 %v218
    %252 = vmatprep.subr.mxu0 0.0
    %253 = vmatpush2.xpose.msra.mxu0 0.0
    %254 = vmatprep.subr.mxu0 0.0
    %255 = vmatpush2.xpose.msra.mxu0 0.0
    %256 = vmatprep.subr.mxu0 0.0
    %257 = vmatpush2.xpose.msra.mxu0 0.0
    %258 = vmatprep.subr.mxu0 0.0
    %259 = vmatpush2.xpose.msra.mxu0 0.0
    %260 = vmatprep.subr.mxu0 0.0
    %261 = vmatpush2.xpose.msra.mxu0 0.0
    %262 = vmatprep.subr.mxu0 0.0
    %263 = vmatpush2.xpose.msra.mxu0 0.0
    %264 = vmatprep.subr.mxu0 0.0
    %265 = vmatpush2.xpose.msra.mxu0 0.0
    %266 = vmatprep.subr.mxu0 0.0
    %267 = vmatpush2.xpose.msra.mxu0 0.0
    %268 = vmatprep.subr.mxu0 0.0
    %269 = vmatpush2.xpose.msra.mxu0 0.0
    %270 = vmatprep.subr.mxu0 0.0
    %271 = vmatpush2.xpose.msra.mxu0 0.0
    %272 = vmatprep.subr.mxu0 0.0
    %273 = vmatpush2.xpose.msra.mxu0 0.0
    %274 = vmatprep.subr.mxu0 0.0
    %275 = vmatpush2.xpose.msra.mxu0 0.0
    %276 = vmatprep.subr.mxu0 0.0
    %277 = vmatpush2.xpose.msra.mxu0 0.0
    %278 = vmatprep.subr.mxu0 0.0
    %279 = vmatpush2.xpose.msra.mxu0 0.0
    %280 = vmatprep.subr.mxu0 0.0
    %281 = vmatpush2.xpose.msra.mxu0 0.0
    %282 = vmatprep.subr.mxu0 0.0
    %283 = vmatpush2.xpose.msra.mxu0 0.0
    %284 = vmatprep.mubr.f32.mxu0 0.0
    %285 = vmatmul.mubr.f32.gmra.mxu0 %v215
    %v286 = vpop.f32.mrf.mxu0
    %v287 = vadd.f32 0.0, %v286
    %v288 = vpop.f32.mrf.mxu0
    %289 = vdwg.mxu0
    %v290 = vmax.f32 %v287, 0.0
    %vm291 = vcmask 31744
    %v293 = vsel %vm291, %v290, 0
    %v296 = vsel %vm291, %v94, 0
    %v299 = vsel %vm291, %v95, 0
    %v302 = vsel %vm291, %v96, 0
    %v305 = vsel %vm291, %v97, 0
    %v308 = vsel %vm291, %v98, 0
    %v311 = vsel %vm291, %v99, 0
    %v314 = vsel %vm291, %v100, 0
    %v317 = vsel %vm291, %v101, 0
    %319 = vmatprep.subr.mxu0 0.0
    %320 = vmatpush1.xpose.msra.mxu0 0.0
    %321 = vmatprep.subr.mxu0 0.0
    %322 = vmatpush1.xpose.msra.mxu0 0.0
    %323 = vmatprep.subr.mxu0 0.0
    %324 = vmatpush1.xpose.msra.mxu0 0.0
    %325 = vmatprep.subr.mxu0 0.0
    %326 = vmatpush1.xpose.msra.mxu0 0.0
    %327 = vmatprep.subr.mxu0 0.0
    %328 = vmatpush1.xpose.msra.mxu0 0.0
    %329 = vmatprep.subr.mxu0 0.0
    %330 = vmatpush1.xpose.msra.mxu0 0.0
    %331 = vmatprep.subr.mxu0 0.0
    %332 = vmatpush1.xpose.msra.mxu0 0.0
    %333 = vmatprep.subr.mxu0 0.0
    %334 = vmatpush1.xpose.msra.mxu0 0.0
    %335 = vmatprep.subr.mxu0 0.0
    %336 = vmatpush1.xpose.msra.mxu0 %v317
    %337 = vmatprep.subr.mxu0 0.0
    %338 = vmatpush1.xpose.msra.mxu0 %v314
    %339 = vmatprep.subr.mxu0 0.0
    %340 = vmatpush1.xpose.msra.mxu0 %v311
    %341 = vmatprep.subr.mxu0 0.0
    %342 = vmatpush1.xpose.msra.mxu0 %v308
    %343 = vmatprep.subr.mxu0 0.0
    %344 = vmatpush1.xpose.msra.mxu0 %v305
    %345 = vmatprep.subr.mxu0 0.0
    %346 = vmatpush1.xpose.msra.mxu0 %v302
    %347 = vmatprep.subr.mxu0 0.0
    %348 = vmatpush1.xpose.msra.mxu0 %v299
    %349 = vmatprep.subr.mxu0 0.0
    %350 = vmatpush1.xpose.msra.mxu0 %v296
    %351 = vmatprep.subr.mxu0 0.0
    %352 = vmatpush2.xpose.msra.mxu0 0.0
    %353 = vmatprep.subr.mxu0 0.0
    %354 = vmatpush2.xpose.msra.mxu0 0.0
    %355 = vmatprep.subr.mxu0 0.0
    %356 = vmatpush2.xpose.msra.mxu0 0.0
    %357 = vmatprep.subr.mxu0 0.0
    %358 = vmatpush2.xpose.msra.mxu0 0.0
    %359 = vmatprep.subr.mxu0 0.0
    %360 = vmatpush2.xpose.msra.mxu0 0.0
    %361 = vmatprep.subr.mxu0 0.0
    %362 = vmatpush2.xpose.msra.mxu0 0.0
    %363 = vmatprep.subr.mxu0 0.0
    %364 = vmatpush2.xpose.msra.mxu0 0.0
    %365 = vmatprep.subr.mxu0 0.0
    %366 = vmatpush2.xpose.msra.mxu0 0.0
    %367 = vmatprep.subr.mxu0 0.0
    %368 = vmatpush2.xpose.msra.mxu0 0.0
    %369 = vmatprep.subr.mxu0 0.0
    %370 = vmatpush2.xpose.msra.mxu0 0.0
    %371 = vmatprep.subr.mxu0 0.0
    %372 = vmatpush2.xpose.msra.mxu0 0.0
    %373 = vmatprep.subr.mxu0 0.0
    %374 = vmatpush2.xpose.msra.mxu0 0.0
    %375 = vmatprep.subr.mxu0 0.0
    %376 = vmatpush2.xpose.msra.mxu0 0.0
    %377 = vmatprep.subr.mxu0 0.0
    %378 = vmatpush2.xpose.msra.mxu0 0.0
    %379 = vmatprep.subr.mxu0 0.0
    %380 = vmatpush2.xpose.msra.mxu0 0.0
    %381 = vmatprep.subr.mxu0 0.0
    %382 = vmatpush2.xpose.msra.mxu0 0.0
    %383 = vmatprep.mubr.f32.mxu0 0.0
    %384 = vmatmul.mubr.f32.gmra.mxu0 %v293
    %v385 = vpop.f32.mrf.mxu0
    %v386 = vadd.f32 0.0, %v385
    %v387 = vpop.f32.mrf.mxu0
    %388 = vdwg.mxu0
    %v389 = vxor.u32 %v386, 2147483648
    %v390 = vmul.f32 %v389, 1.442695
    %v391 = vpow.pop %v390
    %v392 = vadd.f32 %v391, 1.0
    %v393 = vrcp.pop %v392
    %v394 = vmul.f32 1.0, %v393
    %v395 = vlaneseq
    %v396 = vshrl.u32 %v395, 7
    %v397 = vsub.s32 0, %v396
    %v398 = vrot.slane %v394, %v397
    %400 = vbcast.lane.b32.xlu0 %v398, 256
    %v401 = vpop.permute.xlu0 %400
    %s403 = sor.u32 256, 8
    %404 = vbcast.lane.b32.xlu0 %v398, %s403
    %v405 = vpop.permute.xlu0 %404
    %s407 = sor.u32 256, 16
    %408 = vbcast.lane.b32.xlu0 %v398, %s407
    %v409 = vpop.permute.xlu0 %408
    %s411 = sor.u32 256, 24
    %412 = vbcast.lane.b32.xlu0 %v398, %s411
    %v413 = vpop.permute.xlu0 %412
    %s415 = sor.u32 256, 32
    %416 = vbcast.lane.b32.xlu0 %v398, %s415
    %v417 = vpop.permute.xlu0 %416
    %s419 = sor.u32 256, 40
    %420 = vbcast.lane.b32.xlu0 %v398, %s419
    %v421 = vpop.permute.xlu0 %420
    %s423 = sor.u32 256, 48
    %424 = vbcast.lane.b32.xlu0 %v398, %s423
    %v425 = vpop.permute.xlu0 %424
    %s427 = sor.u32 256, 56
    %428 = vbcast.lane.b32.xlu0 %v398, %s427
    %v429 = vpop.permute.xlu0 %428
    %v430 = vlaneseq
    %v431 = vshrl.u32 %v430, 7
    %v432 = vsub.s32 1, %v431
    %v433 = vrot.slane %v394, %v432
    %435 = vbcast.lane.b32.xlu0 %v433, 256
    %v436 = vpop.permute.xlu0 %435
    %s438 = sor.u32 256, 8
    %439 = vbcast.lane.b32.xlu0 %v433, %s438
    %v440 = vpop.permute.xlu0 %439
    %s442 = sor.u32 256, 16
    %443 = vbcast.lane.b32.xlu0 %v433, %s442
    %v444 = vpop.permute.xlu0 %443
    %s446 = sor.u32 256, 24
    %447 = vbcast.lane.b32.xlu0 %v433, %s446
    %v448 = vpop.permute.xlu0 %447
    %s450 = sor.u32 256, 32
    %451 = vbcast.lane.b32.xlu0 %v433, %s450
    %v452 = vpop.permute.xlu0 %451
    %s454 = sor.u32 256, 40
    %455 = vbcast.lane.b32.xlu0 %v433, %s454
    %v456 = vpop.permute.xlu0 %455
    %s458 = sor.u32 256, 48
    %459 = vbcast.lane.b32.xlu0 %v433, %s458
    %v460 = vpop.permute.xlu0 %459
    %s462 = sor.u32 256, 56
    %463 = vbcast.lane.b32.xlu0 %v433, %s462
    %v464 = vpop.permute.xlu0 %463
    %v465 = vmul.f32 %v29, %v401
    %v466 = vmul.f32 %v30, %v405
    %v467 = vmul.f32 %v31, %v409
    %v468 = vmul.f32 %v32, %v413
    %v469 = vmul.f32 %v33, %v417
    %v470 = vmul.f32 %v34, %v421
    %v471 = vmul.f32 %v35, %v425
    %v472 = vmul.f32 %v36, %v429
    %v473 = vmul.f32 %v37, %v436
    %v474 = vmul.f32 %v38, %v440
    %v475 = vmul.f32 %v39, %v444
    %v476 = vmul.f32 %v40, %v448
    %v477 = vmul.f32 %v41, %v452
    %v478 = vmul.f32 %v42, %v456
    %v479 = vmul.f32 %v43, %v460
    %v480 = vmul.f32 %v44, %v464
    %481 = vst [vmem:[#allocation5] sm:$0xff] %v465
    %482 = vst [vmem:[#allocation5 + $0x8] sm:$0xff] %v466
    %483 = vst [vmem:[#allocation5 + $0x10] sm:$0xff] %v467
    %484 = vst [vmem:[#allocation5 + $0x18] sm:$0xff] %v468
    %485 = vst [vmem:[#allocation5 + $0x20] sm:$0xff] %v469
    %486 = vst [vmem:[#allocation5 + $0x28] sm:$0xff] %v470
    %487 = vst [vmem:[#allocation5 + $0x30] sm:$0xff] %v471
    %488 = vst [vmem:[#allocation5 + $0x38] sm:$0xff] %v472
    %489 = vst [vmem:[#allocation5 + $0x40] sm:$0xff] %v473
    %490 = vst [vmem:[#allocation5 + $0x48] sm:$0xff] %v474
    %491 = vst [vmem:[#allocation5 + $0x50] sm:$0xff] %v475
    %492 = vst [vmem:[#allocation5 + $0x58] sm:$0xff] %v476
    %493 = vst [vmem:[#allocation5 + $0x60] sm:$0xff] %v477
    %494 = vst [vmem:[#allocation5 + $0x68] sm:$0xff] %v478
    %495 = vst [vmem:[#allocation5 + $0x70] sm:$0xff] %v479
    %496 = vst [vmem:[#allocation5 + $0x78] sm:$0xff] %v480
    // Predicated region
    $region18: #{tpu_custom_call.1} parent=1 // pred_check
      _
    $region19: #{tpu_custom_call.1} parent=1 // pred_check_branch
      %498 = sbr.rel (0) target = $region21
    $region20: #{tpu_custom_call.1} parent=1 // pred_region
      %s500 = ssub.s32 2048, 2048
      %501 = vsyncadd [#allocation4], %s500
      %s502 = sshll.u32 [#allocation5], 4
      %s503 = int_to_ptr.vmem [resolvable:$true] %s502
      %508 = dma.vmem_to_hbm [thread:$0]  %s503, 2048, %s3, [#allocation4], 128, 128, 8
    $region21: #{tpu_custom_call.1} parent=1 // pred_fallthru
      _
    // Predicated region
    $region22: #{tpu_custom_call.1} parent=1 // pred_check
      _
    $region23: #{tpu_custom_call.1} parent=1 // pred_check_branch
      %510 = sbr.rel (0) target = $region25
    $region24: #{tpu_custom_call.1} parent=1 // pred_region
      %511 = dma.done [#allocation4], 2048
    $region25: #{tpu_custom_call.1} parent=1 // pred_fallthru
      _
    %512 = vsyncpa [#allocation3], 1
    %513 = vsyncpa [#allocation4], 1

</llo_original>
